<compile_context>
chip_gen: v6e
topology: v6e:2x2x1
jax: 0.10.0
libtpu: 0.0.40
codegen_flags: <defaults>
</compile_context>

<pallas_src>
import jax
import jax.numpy as jnp
from jax.experimental import pallas as pl
from jax.experimental.pallas import tpu as pltpu


def rnn_recurrence_kernel(pre_ref, whh_ref, h_out_ref, h_scratch):
    """One time-chunk of the serial tanh-RNN recurrence.

    pre_ref:   (Tc, B, H)  precomputed x_t @ W_ih^T + b_ih + b_hh
    whh_ref:   (H, H)      W_hh^T (constant block across the whole grid)
    h_out_ref: (Tc, B, H)  hidden states for this chunk
    h_scratch: (B, H)      hidden state carried across chunks
    """
    c = pl.program_id(0)

    @pl.when(c == 0)
    def _():
        # hidden=None in the PyTorch forward -> zeros initial hidden state
        h_scratch[...] = jnp.zeros_like(h_scratch)

    whh = whh_ref[...]            # hoisted out of the step loop
    tc = pre_ref.shape[0]

    def step(t, h_prev):
        h_new = jnp.tanh(
            pre_ref[t]
            + jnp.dot(h_prev, whh, preferred_element_type=jnp.float32))
        h_out_ref[t] = h_new
        return h_new

    # Short fixed trip count -> unroll so the scheduler sees a window of steps.
    unroll = True if tc <= 16 else 8
    h_last = jax.lax.fori_loop(0, tc, step, h_scratch[...], unroll=unroll)
    h_scratch[...] = h_last


def _pick_time_chunk(seq_len, max_chunk=128):
    tc = min(seq_len, max_chunk)
    while seq_len % tc != 0:
        tc -= 1
    return tc


def rnn_forward_pallas(x_tokens, params):
    """x_tokens: int32 (B, S).  Returns (logits (B,S,O), hidden (num_layers=1,B,H))."""
    emb = params["emb"].astype(jnp.float32)
    w_ih = params["w_ih"].astype(jnp.float32)
    w_hh = params["w_hh"].astype(jnp.float32)
    b_ih = params["b_ih"].astype(jnp.float32)
    b_hh = params["b_hh"].astype(jnp.float32)
    w_out = params["w_out"].astype(jnp.float32)
    b_out = params["b_out"].astype(jnp.float32)

    B, S = x_tokens.shape
    H = w_hh.shape[0]

    # --- hoisted input projection: embedding(x) @ W_ih^T + (b_ih + b_hh)
    #     == gather of a precomputed (V, H) table, taken time-major directly
    #     (transpose happens on the tiny int token matrix, not activations).
    pre_table = emb @ w_ih.T + (b_ih + b_hh)            # (V, H)
    pre_tm = jnp.take(pre_table, x_tokens.T, axis=0)    # (S, B, H) time-major

    whh_t = w_hh.T                                      # (H, H)

    tc = _pick_time_chunk(S)

    grid_spec = pltpu.PrefetchScalarGridSpec(
        num_scalar_prefetch=0,
        grid=(S // tc,),
        in_specs=[
            pl.BlockSpec((tc, B, H), lambda c: (c, 0, 0)),   # pre-activations chunk
            pl.BlockSpec((H, H), lambda c: (0, 0)),           # W_hh^T (constant block)
        ],
        out_specs=pl.BlockSpec((tc, B, H), lambda c: (c, 0, 0)),
        scratch_shapes=[pltpu.VMEM((B, H), jnp.float32)],     # carried hidden state
    )

    h_all_tm = pl.pallas_call(
        rnn_recurrence_kernel,
        out_shape=jax.ShapeDtypeStruct((S, B, H), jnp.float32),
        grid_spec=grid_spec,
        compiler_params=pltpu.CompilerParams(
            dimension_semantics=("arbitrary",)),   # recurrence is serial in time
    )(pre_tm, whh_t)

    # --- hoisted output projection: one well-shaped matmul, batch-first output
    #     produced directly (no extra (S,B,O)->(B,S,O) transpose pass).
    logits = jnp.einsum("sbh,oh->bso", h_all_tm, w_out,
                        preferred_element_type=jnp.float32) + b_out
    hidden = h_all_tm[-1][None, :, :]                    # (num_layers=1, B, H)
    return logits, hidden


def rnn_forward_reference(x_tokens, params):
    """Pure-JAX reference matching nn.RNN(tanh, batch_first) semantics."""
    emb, w_ih, w_hh, b_ih, b_hh, w_out, b_out = (
        params["emb"], params["w_ih"], params["w_hh"],
        params["b_ih"], params["b_hh"], params["w_out"], params["b_out"])
    embedded = jnp.take(emb, x_tokens, axis=0)          # (B, S, E)
    B, S, _ = embedded.shape
    H = w_hh.shape[0]
    h = jnp.zeros((B, H), jnp.float32)
    outs = []
    for t in range(S):
        h = jnp.tanh(embedded[:, t] @ w_ih.T + h @ w_hh.T + b_ih + b_hh)
        outs.append(h)
    out = jnp.stack(outs, axis=1)                       # (B, S, H)
    logits = out @ w_out.T + b_out                      # (B, S, O)
    return logits, h[None, :, :]


if __name__ == "__main__":
    # module hyperparameters (from the PyTorch script)
    vocab_size = 3
    embedding_dim = 3
    hidden_dim = 3
    num_layers = 1
    output_dim = vocab_size

    # small example shapes
    batch = 8
    seq = 8

    key = jax.random.PRNGKey(0)
    k_emb, k_wih, k_whh, k_bih, k_bhh, k_wo, k_bo, k_x = jax.random.split(key, 8)

    bound = 1.0 / jnp.sqrt(hidden_dim)
    params = {
        # nn.Embedding: N(0,1) init
        "emb": jax.random.normal(k_emb, (vocab_size, embedding_dim), jnp.float32),
        # nn.RNN / nn.Linear: U(-1/sqrt(H), 1/sqrt(H)) init
        "w_ih": jax.random.uniform(k_wih, (hidden_dim, embedding_dim),
                                   jnp.float32, -bound, bound),
        "w_hh": jax.random.uniform(k_whh, (hidden_dim, hidden_dim),
                                   jnp.float32, -bound, bound),
        "b_ih": jax.random.uniform(k_bih, (hidden_dim,), jnp.float32, -bound, bound),
        "b_hh": jax.random.uniform(k_bhh, (hidden_dim,), jnp.float32, -bound, bound),
        "w_out": jax.random.uniform(k_wo, (output_dim, hidden_dim),
                                    jnp.float32, -bound, bound),
        "b_out": jax.random.uniform(k_bo, (output_dim,), jnp.float32, -bound, bound),
    }

    x_tokens = jax.random.randint(k_x, (batch, seq), 0, vocab_size, jnp.int32)

    logits, hidden = jax.jit(rnn_forward_pallas)(x_tokens, params)
    jax.block_until_ready((logits, hidden))

    ref_logits, ref_hidden = rnn_forward_reference(x_tokens, params)
    assert logits.shape == (batch, seq, output_dim)
    assert hidden.shape == (num_layers, batch, hidden_dim)
    assert jnp.allclose(logits, ref_logits, atol=1e-5)
    assert jnp.allclose(hidden, ref_hidden, atol=1e-5)

    print("KERNEL_OK")
</pallas_src>

<mosaic_0001>
module attributes {stable_mosaic.version = 11 : i64} {
  func.func @rnn_recurrence_kernel(%arg0: i32, %arg1: memref<8x8x3xf32, #tpu.memory_space<vmem>>, %arg2: memref<3x3xf32, #tpu.memory_space<vmem>>, %arg3: memref<8x8x3xf32, #tpu.memory_space<vmem>>, %arg4: memref<8x3xf32, #tpu.memory_space<vmem>>) attributes {dimension_semantics = [#tpu.dimension_semantics<arbitrary>], iteration_bounds = array<i64: 1>, scalar_prefetch = 0 : i64, scratch_operands = 1 : i64, tpu.core_type = #tpu.core_type<tc>, window_params = [{transform_indices = @transform_0, window_bounds = array<i64: 8, 8, 3>}, {pipeline_mode = #tpu.pipeline_mode<synchronous>, transform_indices = @transform_1, window_bounds = array<i64: 3, 3>}, {transform_indices = @transform_2, window_bounds = array<i64: 8, 8, 3>}]} {
    %c0_i32 = arith.constant 0 : i32
    %0 = arith.cmpi eq, %arg0, %c0_i32 : i32
    %1 = arith.extui %0 : i1 to i32
    %c0_i32_0 = arith.constant 0 : i32
    %2 = arith.cmpi ne, %1, %c0_i32_0 : i32
    scf.if %2 {
      %cst_46 = arith.constant 0.000000e+00 : f32
      %86 = vector.broadcast %cst_46 : f32 to vector<8x3xf32>
      %c0_47 = arith.constant 0 : index
      %c0_48 = arith.constant 0 : index
      %87 = vector.load %arg4[%c0_47, %c0_48] : memref<8x3xf32, #tpu.memory_space<vmem>>, vector<8x3xf32>
      tpu.vector_store %arg4[%c0_47, %c0_48], %86 {strides = array<i32>} : memref<8x3xf32, #tpu.memory_space<vmem>>, vector<8x3xf32>,
    } else {
    }
    %c0 = arith.constant 0 : index
    %c0_1 = arith.constant 0 : index
    %3 = vector.load %arg2[%c0, %c0_1] : memref<3x3xf32, #tpu.memory_space<vmem>>, vector<3x3xf32>
    %c0_2 = arith.constant 0 : index
    %c0_3 = arith.constant 0 : index
    %4 = vector.load %arg4[%c0_2, %c0_3] : memref<8x3xf32, #tpu.memory_space<vmem>>, vector<8x3xf32>
    %c0_i32_4 = arith.constant 0 : i32
    %5 = arith.index_cast %c0_i32_4 : i32 to index
    %c0_5 = arith.constant 0 : index
    %c0_6 = arith.constant 0 : index
    %6 = vector.load %arg1[%5, %c0_5, %c0_6] : memref<8x8x3xf32, #tpu.memory_space<vmem>>, vector<1x8x3xf32>
    %7 = vector.shape_cast %6 : vector<1x8x3xf32> to vector<8x3xf32>
    %cst = arith.constant dense<0.000000e+00> : vector<8x3xf32>
    %8 = tpu.matmul %4, %3, %cst {dimension_numbers = #tpu.dot_dimension_numbers<[1], [0], [0], [1], [0, 0, 1, 1], [], []>} : vector<8x3xf32>, vector<3x3xf32>, vector<8x3xf32> -> vector<8x3xf32>
    %9 = arith.addf %7, %8 : vector<8x3xf32>
    %10 = math.tanh %9 : vector<8x3xf32>
    %11 = arith.index_cast %c0_i32_4 : i32 to index
    %c0_7 = arith.constant 0 : index
    %c0_8 = arith.constant 0 : index
    %12 = vector.load %arg3[%11, %c0_7, %c0_8] : memref<8x8x3xf32, #tpu.memory_space<vmem>>, vector<1x8x3xf32>
    %13 = vector.shape_cast %12 : vector<1x8x3xf32> to vector<8x3xf32>
    %14 = vector.shape_cast %10 : vector<8x3xf32> to vector<1x8x3xf32>
    tpu.vector_store %arg3[%11, %c0_7, %c0_8], %14 {strides = array<i32>} : memref<8x8x3xf32, #tpu.memory_space<vmem>>, vector<1x8x3xf32>,
    %c1_i32 = arith.constant 1 : i32
    %15 = arith.index_cast %c1_i32 : i32 to index
    %c0_9 = arith.constant 0 : index
    %c0_10 = arith.constant 0 : index
    %16 = vector.load %arg1[%15, %c0_9, %c0_10] : memref<8x8x3xf32, #tpu.memory_space<vmem>>, vector<1x8x3xf32>
    %17 = vector.shape_cast %16 : vector<1x8x3xf32> to vector<8x3xf32>
    %cst_11 = arith.constant dense<0.000000e+00> : vector<8x3xf32>
    %18 = tpu.matmul %10, %3, %cst_11 {dimension_numbers = #tpu.dot_dimension_numbers<[1], [0], [0], [1], [0, 0, 1, 1], [], []>} : vector<8x3xf32>, vector<3x3xf32>, vector<8x3xf32> -> vector<8x3xf32>
    %19 = arith.addf %17, %18 : vector<8x3xf32>
    %20 = math.tanh %19 : vector<8x3xf32>
    %21 = arith.index_cast %c1_i32 : i32 to index
    %c0_12 = arith.constant 0 : index
    %c0_13 = arith.constant 0 : index
    %22 = vector.load %arg3[%21, %c0_12, %c0_13] : memref<8x8x3xf32, #tpu.memory_space<vmem>>, vector<1x8x3xf32>
    %23 = vector.shape_cast %22 : vector<1x8x3xf32> to vector<8x3xf32>
    %24 = vector.shape_cast %20 : vector<8x3xf32> to vector<1x8x3xf32>
    tpu.vector_store %arg3[%21, %c0_12, %c0_13], %24 {strides = array<i32>} : memref<8x8x3xf32, #tpu.memory_space<vmem>>, vector<1x8x3xf32>,
    %c2_i32 = arith.constant 2 : i32
    %25 = arith.index_cast %c2_i32 : i32 to index
    %c0_14 = arith.constant 0 : index
    %c0_15 = arith.constant 0 : index
    %26 = vector.load %arg1[%25, %c0_14, %c0_15] : memref<8x8x3xf32, #tpu.memory_space<vmem>>, vector<1x8x3xf32>
    %27 = vector.shape_cast %26 : vector<1x8x3xf32> to vector<8x3xf32>
    %cst_16 = arith.constant dense<0.000000e+00> : vector<8x3xf32>
    %28 = tpu.matmul %20, %3, %cst_16 {dimension_numbers = #tpu.dot_dimension_numbers<[1], [0], [0], [1], [0, 0, 1, 1], [], []>} : vector<8x3xf32>, vector<3x3xf32>, vector<8x3xf32> -> vector<8x3xf32>
    %29 = arith.addf %27, %28 : vector<8x3xf32>
    %30 = math.tanh %29 : vector<8x3xf32>
    %31 = arith.index_cast %c2_i32 : i32 to index
    %c0_17 = arith.constant 0 : index
    %c0_18 = arith.constant 0 : index
    %32 = vector.load %arg3[%31, %c0_17, %c0_18] : memref<8x8x3xf32, #tpu.memory_space<vmem>>, vector<1x8x3xf32>
    %33 = vector.shape_cast %32 : vector<1x8x3xf32> to vector<8x3xf32>
    %34 = vector.shape_cast %30 : vector<8x3xf32> to vector<1x8x3xf32>
    tpu.vector_store %arg3[%31, %c0_17, %c0_18], %34 {strides = array<i32>} : memref<8x8x3xf32, #tpu.memory_space<vmem>>, vector<1x8x3xf32>,
    %c3_i32 = arith.constant 3 : i32
    %35 = arith.index_cast %c3_i32 : i32 to index
    %c0_19 = arith.constant 0 : index
    %c0_20 = arith.constant 0 : index
    %36 = vector.load %arg1[%35, %c0_19, %c0_20] : memref<8x8x3xf32, #tpu.memory_space<vmem>>, vector<1x8x3xf32>
    %37 = vector.shape_cast %36 : vector<1x8x3xf32> to vector<8x3xf32>
    %cst_21 = arith.constant dense<0.000000e+00> : vector<8x3xf32>
    %38 = tpu.matmul %30, %3, %cst_21 {dimension_numbers = #tpu.dot_dimension_numbers<[1], [0], [0], [1], [0, 0, 1, 1], [], []>} : vector<8x3xf32>, vector<3x3xf32>, vector<8x3xf32> -> vector<8x3xf32>
    %39 = arith.addf %37, %38 : vector<8x3xf32>
    %40 = math.tanh %39 : vector<8x3xf32>
    %41 = arith.index_cast %c3_i32 : i32 to index
    %c0_22 = arith.constant 0 : index
    %c0_23 = arith.constant 0 : index
    %42 = vector.load %arg3[%41, %c0_22, %c0_23] : memref<8x8x3xf32, #tpu.memory_space<vmem>>, vector<1x8x3xf32>
    %43 = vector.shape_cast %42 : vector<1x8x3xf32> to vector<8x3xf32>
    %44 = vector.shape_cast %40 : vector<8x3xf32> to vector<1x8x3xf32>
    tpu.vector_store %arg3[%41, %c0_22, %c0_23], %44 {strides = array<i32>} : memref<8x8x3xf32, #tpu.memory_space<vmem>>, vector<1x8x3xf32>,
    %c4_i32 = arith.constant 4 : i32
    %45 = arith.index_cast %c4_i32 : i32 to index
    %c0_24 = arith.constant 0 : index
    %c0_25 = arith.constant 0 : index
    %46 = vector.load %arg1[%45, %c0_24, %c0_25] : memref<8x8x3xf32, #tpu.memory_space<vmem>>, vector<1x8x3xf32>
    %47 = vector.shape_cast %46 : vector<1x8x3xf32> to vector<8x3xf32>
    %cst_26 = arith.constant dense<0.000000e+00> : vector<8x3xf32>
    %48 = tpu.matmul %40, %3, %cst_26 {dimension_numbers = #tpu.dot_dimension_numbers<[1], [0], [0], [1], [0, 0, 1, 1], [], []>} : vector<8x3xf32>, vector<3x3xf32>, vector<8x3xf32> -> vector<8x3xf32>
    %49 = arith.addf %47, %48 : vector<8x3xf32>
    %50 = math.tanh %49 : vector<8x3xf32>
    %51 = arith.index_cast %c4_i32 : i32 to index
    %c0_27 = arith.constant 0 : index
    %c0_28 = arith.constant 0 : index
    %52 = vector.load %arg3[%51, %c0_27, %c0_28] : memref<8x8x3xf32, #tpu.memory_space<vmem>>, vector<1x8x3xf32>
    %53 = vector.shape_cast %52 : vector<1x8x3xf32> to vector<8x3xf32>
    %54 = vector.shape_cast %50 : vector<8x3xf32> to vector<1x8x3xf32>
    tpu.vector_store %arg3[%51, %c0_27, %c0_28], %54 {strides = array<i32>} : memref<8x8x3xf32, #tpu.memory_space<vmem>>, vector<1x8x3xf32>,
    %c5_i32 = arith.constant 5 : i32
    %55 = arith.index_cast %c5_i32 : i32 to index
    %c0_29 = arith.constant 0 : index
    %c0_30 = arith.constant 0 : index
    %56 = vector.load %arg1[%55, %c0_29, %c0_30] : memref<8x8x3xf32, #tpu.memory_space<vmem>>, vector<1x8x3xf32>
    %57 = vector.shape_cast %56 : vector<1x8x3xf32> to vector<8x3xf32>
    %cst_31 = arith.constant dense<0.000000e+00> : vector<8x3xf32>
    %58 = tpu.matmul %50, %3, %cst_31 {dimension_numbers = #tpu.dot_dimension_numbers<[1], [0], [0], [1], [0, 0, 1, 1], [], []>} : vector<8x3xf32>, vector<3x3xf32>, vector<8x3xf32> -> vector<8x3xf32>
    %59 = arith.addf %57, %58 : vector<8x3xf32>
    %60 = math.tanh %59 : vector<8x3xf32>
    %61 = arith.index_cast %c5_i32 : i32 to index
    %c0_32 = arith.constant 0 : index
    %c0_33 = arith.constant 0 : index
    %62 = vector.load %arg3[%61, %c0_32, %c0_33] : memref<8x8x3xf32, #tpu.memory_space<vmem>>, vector<1x8x3xf32>
    %63 = vector.shape_cast %62 : vector<1x8x3xf32> to vector<8x3xf32>
    %64 = vector.shape_cast %60 : vector<8x3xf32> to vector<1x8x3xf32>
    tpu.vector_store %arg3[%61, %c0_32, %c0_33], %64 {strides = array<i32>} : memref<8x8x3xf32, #tpu.memory_space<vmem>>, vector<1x8x3xf32>,
    %c6_i32 = arith.constant 6 : i32
    %65 = arith.index_cast %c6_i32 : i32 to index
    %c0_34 = arith.constant 0 : index
    %c0_35 = arith.constant 0 : index
    %66 = vector.load %arg1[%65, %c0_34, %c0_35] : memref<8x8x3xf32, #tpu.memory_space<vmem>>, vector<1x8x3xf32>
    %67 = vector.shape_cast %66 : vector<1x8x3xf32> to vector<8x3xf32>
    %cst_36 = arith.constant dense<0.000000e+00> : vector<8x3xf32>
    %68 = tpu.matmul %60, %3, %cst_36 {dimension_numbers = #tpu.dot_dimension_numbers<[1], [0], [0], [1], [0, 0, 1, 1], [], []>} : vector<8x3xf32>, vector<3x3xf32>, vector<8x3xf32> -> vector<8x3xf32>
    %69 = arith.addf %67, %68 : vector<8x3xf32>
    %70 = math.tanh %69 : vector<8x3xf32>
    %71 = arith.index_cast %c6_i32 : i32 to index
    %c0_37 = arith.constant 0 : index
    %c0_38 = arith.constant 0 : index
    %72 = vector.load %arg3[%71, %c0_37, %c0_38] : memref<8x8x3xf32, #tpu.memory_space<vmem>>, vector<1x8x3xf32>
    %73 = vector.shape_cast %72 : vector<1x8x3xf32> to vector<8x3xf32>
    %74 = vector.shape_cast %70 : vector<8x3xf32> to vector<1x8x3xf32>
    tpu.vector_store %arg3[%71, %c0_37, %c0_38], %74 {strides = array<i32>} : memref<8x8x3xf32, #tpu.memory_space<vmem>>, vector<1x8x3xf32>,
    %c7_i32 = arith.constant 7 : i32
    %75 = arith.index_cast %c7_i32 : i32 to index
    %c0_39 = arith.constant 0 : index
    %c0_40 = arith.constant 0 : index
    %76 = vector.load %arg1[%75, %c0_39, %c0_40] : memref<8x8x3xf32, #tpu.memory_space<vmem>>, vector<1x8x3xf32>
    %77 = vector.shape_cast %76 : vector<1x8x3xf32> to vector<8x3xf32>
    %cst_41 = arith.constant dense<0.000000e+00> : vector<8x3xf32>
    %78 = tpu.matmul %70, %3, %cst_41 {dimension_numbers = #tpu.dot_dimension_numbers<[1], [0], [0], [1], [0, 0, 1, 1], [], []>} : vector<8x3xf32>, vector<3x3xf32>, vector<8x3xf32> -> vector<8x3xf32>
    %79 = arith.addf %77, %78 : vector<8x3xf32>
    %80 = math.tanh %79 : vector<8x3xf32>
    %81 = arith.index_cast %c7_i32 : i32 to index
    %c0_42 = arith.constant 0 : index
    %c0_43 = arith.constant 0 : index
    %82 = vector.load %arg3[%81, %c0_42, %c0_43] : memref<8x8x3xf32, #tpu.memory_space<vmem>>, vector<1x8x3xf32>
    %83 = vector.shape_cast %82 : vector<1x8x3xf32> to vector<8x3xf32>
    %84 = vector.shape_cast %80 : vector<8x3xf32> to vector<1x8x3xf32>
    tpu.vector_store %arg3[%81, %c0_42, %c0_43], %84 {strides = array<i32>} : memref<8x8x3xf32, #tpu.memory_space<vmem>>, vector<1x8x3xf32>,
    %c8_i32 = arith.constant 8 : i32
    %c0_44 = arith.constant 0 : index
    %c0_45 = arith.constant 0 : index
    %85 = vector.load %arg4[%c0_44, %c0_45] : memref<8x3xf32, #tpu.memory_space<vmem>>, vector<8x3xf32>
    tpu.vector_store %arg4[%c0_44, %c0_45], %80 {strides = array<i32>} : memref<8x3xf32, #tpu.memory_space<vmem>>, vector<8x3xf32>,
    return
  }
  func.func @transform_0(%arg0: i32) -> (i32, i32, i32) {
    %c0_i32 = arith.constant 0 : i32
    %c0_i32_0 = arith.constant 0 : i32
    %c0_i32_1 = arith.constant 0 : i32
    return %arg0, %c0_i32, %c0_i32_0 : i32, i32, i32
  }
  func.func @transform_1(%arg0: i32) -> (i32, i32) {
    %c0_i32 = arith.constant 0 : i32
    %c0_i32_0 = arith.constant 0 : i32
    %c0_i32_1 = arith.constant 0 : i32
    return %c0_i32, %c0_i32_0 : i32, i32
  }
  func.func @transform_2(%arg0: i32) -> (i32, i32, i32) {
    %c0_i32 = arith.constant 0 : i32
    %c0_i32_0 = arith.constant 0 : i32
    %c0_i32_1 = arith.constant 0 : i32
    return %arg0, %c0_i32, %c0_i32_0 : i32, i32, i32
  }
}

</mosaic_0001>

<llo_original>
// kernel: rnn_forward_pallas.1
$region0: #{rnn_forward_pallas.1}
  #allocation0 [shape = 'u32[]', space=smem, size = 0x4, offset = 0x4, fixed_abs, tag = 'smem constant byte address 0x4 - core index']
  #allocation1 [shape = 'u32[144,128]{1,0:T(1,128)}', space=vmem, size = 0x12000, scoped, tag = 'internal scratch']
  #allocation2 [shape = 'f32[8,3]{1,0:T(8,128)}', space=vmem, size = 0x1000, scoped, tag = 'scratch operand']
  %s0 = inlined_call_operand.vmem [shape: f32[8,8,3], index: 0, kind: input, shape index: {}]
  %s1 = inlined_call_operand.vmem [shape: f32[3,3], index: 1, kind: input, shape index: {}]
  %s2 = inlined_call_operand.vmem [shape: f32[8,8,3], index: 2, kind: output, shape index: {}]
  %s3 = sld [smem:[#allocation0]]
  $region22: #{rnn_forward_pallas.1} parent=0
    _
  %s5 = ssub.s32 1, %s3
  %s6 = scalar_select 0, %s5, %s3
  // Predicated region
  $region2: #{rnn_forward_pallas.1} parent=0 // pred_check
    _
  $region3: #{rnn_forward_pallas.1} parent=0 // pred_check_branch
    %8 = sbr.rel (0) target = $region5
  $region4: #{rnn_forward_pallas.1} parent=0 // pred_region
    _
  $region5: #{rnn_forward_pallas.1} parent=0 // pred_fallthru
    _
  // Predicated region
  $region6: #{rnn_forward_pallas.1} parent=0 // pred_check
    _
  $region7: #{rnn_forward_pallas.1} parent=0 // pred_check_branch
    %10 = sbr.rel (0) target = $region9
  $region8: #{rnn_forward_pallas.1} parent=0 // pred_region
    _
  $region9: #{rnn_forward_pallas.1} parent=0 // pred_fallthru
    _
  %p11 = scmp.eq.s32.totalorder 0, 0
  // Predicated region
  $region10: #{rnn_forward_pallas.1} parent=0 // pred_check
    %p12 = pneg %p11
  $region11: #{rnn_forward_pallas.1} parent=0 // pred_check_branch
    %14 = sbr.rel (%p12) target = $region13
  $region12: #{rnn_forward_pallas.1} parent=0 // pred_region
    %vm15 = vcmask 23552
    %16 = vst.msk [vmem:[#allocation2] sm:$0xff] %vm15, 0.0
  $region13: #{rnn_forward_pallas.1} parent=0 // pred_fallthru
    _
  %v17 = vld [vmem:[%s1] sm:$0x7]
  %v18 = vld [vmem:[#allocation2] sm:$0xff]
  %v19 = vld [vmem:[%s0] sm:$0xff]
  %vm20 = vcmask 23552
  %v22 = vsel %vm20, %v18, 0
  %vm24 = vcmask 1042432
  %v26 = vsel %vm24, %v17, 0
  %28 = vmatprep.subr.mxu0 0.0
  %29 = vmatpush1.msra.mxu0 0.0
  %30 = vmatprep.subr.mxu0 0.0
  %31 = vmatpush1.msra.mxu0 0.0
  %32 = vmatprep.subr.mxu0 0.0
  %33 = vmatpush1.msra.mxu0 0.0
  %34 = vmatprep.subr.mxu0 0.0
  %35 = vmatpush1.msra.mxu0 0.0
  %36 = vmatprep.subr.mxu0 0.0
  %37 = vmatpush1.msra.mxu0 0.0
  %38 = vmatprep.subr.mxu0 0.0
  %39 = vmatpush1.msra.mxu0 0.0
  %40 = vmatprep.subr.mxu0 0.0
  %41 = vmatpush1.msra.mxu0 0.0
  %42 = vmatprep.subr.mxu0 0.0
  %43 = vmatpush1.msra.mxu0 0.0
  %44 = vmatprep.subr.mxu0 0.0
  %45 = vmatpush1.msra.mxu0 0.0
  %46 = vmatprep.subr.mxu0 0.0
  %47 = vmatpush1.msra.mxu0 0.0
  %48 = vmatprep.subr.mxu0 0.0
  %49 = vmatpush1.msra.mxu0 0.0
  %50 = vmatprep.subr.mxu0 0.0
  %51 = vmatpush1.msra.mxu0 0.0
  %52 = vmatprep.subr.mxu0 0.0
  %53 = vmatpush1.msra.mxu0 0.0
  %54 = vmatprep.subr.mxu0 0.0
  %55 = vmatpush1.msra.mxu0 0.0
  %56 = vmatprep.subr.mxu0 0.0
  %57 = vmatpush1.msra.mxu0 0.0
  %58 = vmatprep.subr.mxu0 0.0
  %59 = vmatpush1.msra.mxu0 %v26
  %60 = vmatprep.subr.mxu0 0.0
  %61 = vmatpush2.msra.mxu0 0.0
  %62 = vmatprep.subr.mxu0 0.0
  %63 = vmatpush2.msra.mxu0 0.0
  %64 = vmatprep.subr.mxu0 0.0
  %65 = vmatpush2.msra.mxu0 0.0
  %66 = vmatprep.subr.mxu0 0.0
  %67 = vmatpush2.msra.mxu0 0.0
  %68 = vmatprep.subr.mxu0 0.0
  %69 = vmatpush2.msra.mxu0 0.0
  %70 = vmatprep.subr.mxu0 0.0
  %71 = vmatpush2.msra.mxu0 0.0
  %72 = vmatprep.subr.mxu0 0.0
  %73 = vmatpush2.msra.mxu0 0.0
  %74 = vmatprep.subr.mxu0 0.0
  %75 = vmatpush2.msra.mxu0 0.0
  %76 = vmatprep.subr.mxu0 0.0
  %77 = vmatpush2.msra.mxu0 0.0
  %78 = vmatprep.subr.mxu0 0.0
  %79 = vmatpush2.msra.mxu0 0.0
  %80 = vmatprep.subr.mxu0 0.0
  %81 = vmatpush2.msra.mxu0 0.0
  %82 = vmatprep.subr.mxu0 0.0
  %83 = vmatpush2.msra.mxu0 0.0
  %84 = vmatprep.subr.mxu0 0.0
  %85 = vmatpush2.msra.mxu0 0.0
  %86 = vmatprep.subr.mxu0 0.0
  %87 = vmatpush2.msra.mxu0 0.0
  %88 = vmatprep.subr.mxu0 0.0
  %89 = vmatpush2.msra.mxu0 0.0
  %90 = vmatprep.subr.mxu0 0.0
  %91 = vmatpush2.msra.mxu0 0.0
  %92 = vmatprep.mubr.f32.mxu0 0.0
  %93 = vmatmul.mubr.f32.gmra.mxu0 %v22
  %v94 = vpop.f32.mrf.mxu0
  %v95 = vadd.f32 0.0, %v94
  %v96 = vpop.f32.mrf.mxu0
  %97 = vdwg.mxu0
  %v98 = vadd.f32 %v19, %v95
  %v99 = vtanh.pop %v98
  %100 = vst.msk [vmem:[%s2] sm:$0xff] %vm20, %v99
  %s101 = scalar_lea.vmem %s0, 8
  %v102 = vld [vmem:[%s101] sm:$0xff]
  %v104 = vsel %vm20, %v99, 0
  %106 = vmatprep.subr.mxu0 0.0
  %107 = vmatpush1.msra.mxu0 0.0
  %108 = vmatprep.subr.mxu0 0.0
  %109 = vmatpush1.msra.mxu0 0.0
  %110 = vmatprep.subr.mxu0 0.0
  %111 = vmatpush1.msra.mxu0 0.0
  %112 = vmatprep.subr.mxu0 0.0
  %113 = vmatpush1.msra.mxu0 0.0
  %114 = vmatprep.subr.mxu0 0.0
  %115 = vmatpush1.msra.mxu0 0.0
  %116 = vmatprep.subr.mxu0 0.0
  %117 = vmatpush1.msra.mxu0 0.0
  %118 = vmatprep.subr.mxu0 0.0
  %119 = vmatpush1.msra.mxu0 0.0
  %120 = vmatprep.subr.mxu0 0.0
  %121 = vmatpush1.msra.mxu0 0.0
  %122 = vmatprep.subr.mxu0 0.0
  %123 = vmatpush1.msra.mxu0 0.0
  %124 = vmatprep.subr.mxu0 0.0
  %125 = vmatpush1.msra.mxu0 0.0
  %126 = vmatprep.subr.mxu0 0.0
  %127 = vmatpush1.msra.mxu0 0.0
  %128 = vmatprep.subr.mxu0 0.0
  %129 = vmatpush1.msra.mxu0 0.0
  %130 = vmatprep.subr.mxu0 0.0
  %131 = vmatpush1.msra.mxu0 0.0
  %132 = vmatprep.subr.mxu0 0.0
  %133 = vmatpush1.msra.mxu0 0.0
  %134 = vmatprep.subr.mxu0 0.0
  %135 = vmatpush1.msra.mxu0 0.0
  %136 = vmatprep.subr.mxu0 0.0
  %137 = vmatpush1.msra.mxu0 %v26
  %138 = vmatprep.subr.mxu0 0.0
  %139 = vmatpush2.msra.mxu0 0.0
  %140 = vmatprep.subr.mxu0 0.0
  %141 = vmatpush2.msra.mxu0 0.0
  %142 = vmatprep.subr.mxu0 0.0
  %143 = vmatpush2.msra.mxu0 0.0
  %144 = vmatprep.subr.mxu0 0.0
  %145 = vmatpush2.msra.mxu0 0.0
  %146 = vmatprep.subr.mxu0 0.0
  %147 = vmatpush2.msra.mxu0 0.0
  %148 = vmatprep.subr.mxu0 0.0
  %149 = vmatpush2.msra.mxu0 0.0
  %150 = vmatprep.subr.mxu0 0.0
  %151 = vmatpush2.msra.mxu0 0.0
  %152 = vmatprep.subr.mxu0 0.0
  %153 = vmatpush2.msra.mxu0 0.0
  %154 = vmatprep.subr.mxu0 0.0
  %155 = vmatpush2.msra.mxu0 0.0
  %156 = vmatprep.subr.mxu0 0.0
  %157 = vmatpush2.msra.mxu0 0.0
  %158 = vmatprep.subr.mxu0 0.0
  %159 = vmatpush2.msra.mxu0 0.0
  %160 = vmatprep.subr.mxu0 0.0
  %161 = vmatpush2.msra.mxu0 0.0
  %162 = vmatprep.subr.mxu0 0.0
  %163 = vmatpush2.msra.mxu0 0.0
  %164 = vmatprep.subr.mxu0 0.0
  %165 = vmatpush2.msra.mxu0 0.0
  %166 = vmatprep.subr.mxu0 0.0
  %167 = vmatpush2.msra.mxu0 0.0
  %168 = vmatprep.subr.mxu0 0.0
  %169 = vmatpush2.msra.mxu0 0.0
  %170 = vmatprep.mubr.f32.mxu0 0.0
  %171 = vmatmul.mubr.f32.gmra.mxu0 %v104
  %v172 = vpop.f32.mrf.mxu0
  %v173 = vadd.f32 0.0, %v172
  %v174 = vpop.f32.mrf.mxu0
  %175 = vdwg.mxu0
  %v176 = vadd.f32 %v102, %v173
  %v177 = vtanh.pop %v176
  %s178 = scalar_lea.vmem %s2, 8
  %179 = vst.msk [vmem:[%s178] sm:$0xff] %vm20, %v177
  %s180 = scalar_lea.vmem %s0, 16
  %v181 = vld [vmem:[%s180] sm:$0xff]
  %v183 = vsel %vm20, %v177, 0
  %185 = vmatprep.subr.mxu0 0.0
  %186 = vmatpush1.msra.mxu0 0.0
  %187 = vmatprep.subr.mxu0 0.0
  %188 = vmatpush1.msra.mxu0 0.0
  %189 = vmatprep.subr.mxu0 0.0
  %190 = vmatpush1.msra.mxu0 0.0
  %191 = vmatprep.subr.mxu0 0.0
  %192 = vmatpush1.msra.mxu0 0.0
  %193 = vmatprep.subr.mxu0 0.0
  %194 = vmatpush1.msra.mxu0 0.0
  %195 = vmatprep.subr.mxu0 0.0
  %196 = vmatpush1.msra.mxu0 0.0
  %197 = vmatprep.subr.mxu0 0.0
  %198 = vmatpush1.msra.mxu0 0.0
  %199 = vmatprep.subr.mxu0 0.0
  %200 = vmatpush1.msra.mxu0 0.0
  %201 = vmatprep.subr.mxu0 0.0
  %202 = vmatpush1.msra.mxu0 0.0
  %203 = vmatprep.subr.mxu0 0.0
  %204 = vmatpush1.msra.mxu0 0.0
  %205 = vmatprep.subr.mxu0 0.0
  %206 = vmatpush1.msra.mxu0 0.0
  %207 = vmatprep.subr.mxu0 0.0
  %208 = vmatpush1.msra.mxu0 0.0
  %209 = vmatprep.subr.mxu0 0.0
  %210 = vmatpush1.msra.mxu0 0.0
  %211 = vmatprep.subr.mxu0 0.0
  %212 = vmatpush1.msra.mxu0 0.0
  %213 = vmatprep.subr.mxu0 0.0
  %214 = vmatpush1.msra.mxu0 0.0
  %215 = vmatprep.subr.mxu0 0.0
  %216 = vmatpush1.msra.mxu0 %v26
  %217 = vmatprep.subr.mxu0 0.0
  %218 = vmatpush2.msra.mxu0 0.0
  %219 = vmatprep.subr.mxu0 0.0
  %220 = vmatpush2.msra.mxu0 0.0
  %221 = vmatprep.subr.mxu0 0.0
  %222 = vmatpush2.msra.mxu0 0.0
  %223 = vmatprep.subr.mxu0 0.0
  %224 = vmatpush2.msra.mxu0 0.0
  %225 = vmatprep.subr.mxu0 0.0
  %226 = vmatpush2.msra.mxu0 0.0
  %227 = vmatprep.subr.mxu0 0.0
  %228 = vmatpush2.msra.mxu0 0.0
  %229 = vmatprep.subr.mxu0 0.0
  %230 = vmatpush2.msra.mxu0 0.0
  %231 = vmatprep.subr.mxu0 0.0
  %232 = vmatpush2.msra.mxu0 0.0
  %233 = vmatprep.subr.mxu0 0.0
  %234 = vmatpush2.msra.mxu0 0.0
  %235 = vmatprep.subr.mxu0 0.0
  %236 = vmatpush2.msra.mxu0 0.0
  %237 = vmatprep.subr.mxu0 0.0
  %238 = vmatpush2.msra.mxu0 0.0
  %239 = vmatprep.subr.mxu0 0.0
  %240 = vmatpush2.msra.mxu0 0.0
  %241 = vmatprep.subr.mxu0 0.0
  %242 = vmatpush2.msra.mxu0 0.0
  %243 = vmatprep.subr.mxu0 0.0
  %244 = vmatpush2.msra.mxu0 0.0
  %245 = vmatprep.subr.mxu0 0.0
  %246 = vmatpush2.msra.mxu0 0.0
  %247 = vmatprep.subr.mxu0 0.0
  %248 = vmatpush2.msra.mxu0 0.0
  %249 = vmatprep.mubr.f32.mxu0 0.0
  %250 = vmatmul.mubr.f32.gmra.mxu0 %v183
  %v251 = vpop.f32.mrf.mxu0
  %v252 = vadd.f32 0.0, %v251
  %v253 = vpop.f32.mrf.mxu0
  %254 = vdwg.mxu0
  %v255 = vadd.f32 %v181, %v252
  %v256 = vtanh.pop %v255
  %s257 = scalar_lea.vmem %s2, 16
  %258 = vst.msk [vmem:[%s257] sm:$0xff] %vm20, %v256
  %s259 = scalar_lea.vmem %s0, 24
  %v260 = vld [vmem:[%s259] sm:$0xff]
  %v262 = vsel %vm20, %v256, 0
  %264 = vmatprep.subr.mxu0 0.0
  %265 = vmatpush1.msra.mxu0 0.0
  %266 = vmatprep.subr.mxu0 0.0
  %267 = vmatpush1.msra.mxu0 0.0
  %268 = vmatprep.subr.mxu0 0.0
  %269 = vmatpush1.msra.mxu0 0.0
  %270 = vmatprep.subr.mxu0 0.0
  %271 = vmatpush1.msra.mxu0 0.0
  %272 = vmatprep.subr.mxu0 0.0
  %273 = vmatpush1.msra.mxu0 0.0
  %274 = vmatprep.subr.mxu0 0.0
  %275 = vmatpush1.msra.mxu0 0.0
  %276 = vmatprep.subr.mxu0 0.0
  %277 = vmatpush1.msra.mxu0 0.0
  %278 = vmatprep.subr.mxu0 0.0
  %279 = vmatpush1.msra.mxu0 0.0
  %280 = vmatprep.subr.mxu0 0.0
  %281 = vmatpush1.msra.mxu0 0.0
  %282 = vmatprep.subr.mxu0 0.0
  %283 = vmatpush1.msra.mxu0 0.0
  %284 = vmatprep.subr.mxu0 0.0
  %285 = vmatpush1.msra.mxu0 0.0
  %286 = vmatprep.subr.mxu0 0.0
  %287 = vmatpush1.msra.mxu0 0.0
  %288 = vmatprep.subr.mxu0 0.0
  %289 = vmatpush1.msra.mxu0 0.0
  %290 = vmatprep.subr.mxu0 0.0
  %291 = vmatpush1.msra.mxu0 0.0
  %292 = vmatprep.subr.mxu0 0.0
  %293 = vmatpush1.msra.mxu0 0.0
  %294 = vmatprep.subr.mxu0 0.0
  %295 = vmatpush1.msra.mxu0 %v26
  %296 = vmatprep.subr.mxu0 0.0
  %297 = vmatpush2.msra.mxu0 0.0
  %298 = vmatprep.subr.mxu0 0.0
  %299 = vmatpush2.msra.mxu0 0.0
  %300 = vmatprep.subr.mxu0 0.0
  %301 = vmatpush2.msra.mxu0 0.0
  %302 = vmatprep.subr.mxu0 0.0
  %303 = vmatpush2.msra.mxu0 0.0
  %304 = vmatprep.subr.mxu0 0.0
  %305 = vmatpush2.msra.mxu0 0.0
  %306 = vmatprep.subr.mxu0 0.0
  %307 = vmatpush2.msra.mxu0 0.0
  %308 = vmatprep.subr.mxu0 0.0
  %309 = vmatpush2.msra.mxu0 0.0
  %310 = vmatprep.subr.mxu0 0.0
  %311 = vmatpush2.msra.mxu0 0.0
  %312 = vmatprep.subr.mxu0 0.0
  %313 = vmatpush2.msra.mxu0 0.0
  %314 = vmatprep.subr.mxu0 0.0
  %315 = vmatpush2.msra.mxu0 0.0
  %316 = vmatprep.subr.mxu0 0.0
  %317 = vmatpush2.msra.mxu0 0.0
  %318 = vmatprep.subr.mxu0 0.0
  %319 = vmatpush2.msra.mxu0 0.0
  %320 = vmatprep.subr.mxu0 0.0
  %321 = vmatpush2.msra.mxu0 0.0
  %322 = vmatprep.subr.mxu0 0.0
  %323 = vmatpush2.msra.mxu0 0.0
  %324 = vmatprep.subr.mxu0 0.0
  %325 = vmatpush2.msra.mxu0 0.0
  %326 = vmatprep.subr.mxu0 0.0
  %327 = vmatpush2.msra.mxu0 0.0
  %328 = vmatprep.mubr.f32.mxu0 0.0
  %329 = vmatmul.mubr.f32.gmra.mxu0 %v262
  %v330 = vpop.f32.mrf.mxu0
  %v331 = vadd.f32 0.0, %v330
  %v332 = vpop.f32.mrf.mxu0
  %333 = vdwg.mxu0
  %v334 = vadd.f32 %v260, %v331
  %v335 = vtanh.pop %v334
  %s336 = scalar_lea.vmem %s2, 24
  %337 = vst.msk [vmem:[%s336] sm:$0xff] %vm20, %v335
  %s338 = scalar_lea.vmem %s0, 32
  %v339 = vld [vmem:[%s338] sm:$0xff]
  %v341 = vsel %vm20, %v335, 0
  %343 = vmatprep.subr.mxu0 0.0
  %344 = vmatpush1.msra.mxu0 0.0
  %345 = vmatprep.subr.mxu0 0.0
  %346 = vmatpush1.msra.mxu0 0.0
  %347 = vmatprep.subr.mxu0 0.0
  %348 = vmatpush1.msra.mxu0 0.0
  %349 = vmatprep.subr.mxu0 0.0
  %350 = vmatpush1.msra.mxu0 0.0
  %351 = vmatprep.subr.mxu0 0.0
  %352 = vmatpush1.msra.mxu0 0.0
  %353 = vmatprep.subr.mxu0 0.0
  %354 = vmatpush1.msra.mxu0 0.0
  %355 = vmatprep.subr.mxu0 0.0
  %356 = vmatpush1.msra.mxu0 0.0
  %357 = vmatprep.subr.mxu0 0.0
  %358 = vmatpush1.msra.mxu0 0.0
  %359 = vmatprep.subr.mxu0 0.0
  %360 = vmatpush1.msra.mxu0 0.0
  %361 = vmatprep.subr.mxu0 0.0
  %362 = vmatpush1.msra.mxu0 0.0
  %363 = vmatprep.subr.mxu0 0.0
  %364 = vmatpush1.msra.mxu0 0.0
  %365 = vmatprep.subr.mxu0 0.0
  %366 = vmatpush1.msra.mxu0 0.0
  %367 = vmatprep.subr.mxu0 0.0
  %368 = vmatpush1.msra.mxu0 0.0
  %369 = vmatprep.subr.mxu0 0.0
  %370 = vmatpush1.msra.mxu0 0.0
  %371 = vmatprep.subr.mxu0 0.0
  %372 = vmatpush1.msra.mxu0 0.0
  %373 = vmatprep.subr.mxu0 0.0
  %374 = vmatpush1.msra.mxu0 %v26
  %375 = vmatprep.subr.mxu0 0.0
  %376 = vmatpush2.msra.mxu0 0.0
  %377 = vmatprep.subr.mxu0 0.0
  %378 = vmatpush2.msra.mxu0 0.0
  %379 = vmatprep.subr.mxu0 0.0
  %380 = vmatpush2.msra.mxu0 0.0
  %381 = vmatprep.subr.mxu0 0.0
  %382 = vmatpush2.msra.mxu0 0.0
  %383 = vmatprep.subr.mxu0 0.0
  %384 = vmatpush2.msra.mxu0 0.0
  %385 = vmatprep.subr.mxu0 0.0
  %386 = vmatpush2.msra.mxu0 0.0
  %387 = vmatprep.subr.mxu0 0.0
  %388 = vmatpush2.msra.mxu0 0.0
  %389 = vmatprep.subr.mxu0 0.0
  %390 = vmatpush2.msra.mxu0 0.0
  %391 = vmatprep.subr.mxu0 0.0
  %392 = vmatpush2.msra.mxu0 0.0
  %393 = vmatprep.subr.mxu0 0.0
  %394 = vmatpush2.msra.mxu0 0.0
  %395 = vmatprep.subr.mxu0 0.0
  %396 = vmatpush2.msra.mxu0 0.0
  %397 = vmatprep.subr.mxu0 0.0
  %398 = vmatpush2.msra.mxu0 0.0
  %399 = vmatprep.subr.mxu0 0.0
  %400 = vmatpush2.msra.mxu0 0.0
  %401 = vmatprep.subr.mxu0 0.0
  %402 = vmatpush2.msra.mxu0 0.0
  %403 = vmatprep.subr.mxu0 0.0
  %404 = vmatpush2.msra.mxu0 0.0
  %405 = vmatprep.subr.mxu0 0.0
  %406 = vmatpush2.msra.mxu0 0.0
  %407 = vmatprep.mubr.f32.mxu0 0.0
  %408 = vmatmul.mubr.f32.gmra.mxu0 %v341
  %v409 = vpop.f32.mrf.mxu0
  %v410 = vadd.f32 0.0, %v409
  %v411 = vpop.f32.mrf.mxu0
  %412 = vdwg.mxu0
  %v413 = vadd.f32 %v339, %v410
  %v414 = vtanh.pop %v413
  %s415 = scalar_lea.vmem %s2, 32
  %416 = vst.msk [vmem:[%s415] sm:$0xff] %vm20, %v414
  %s417 = scalar_lea.vmem %s0, 40
  %v418 = vld [vmem:[%s417] sm:$0xff]
  %v420 = vsel %vm20, %v414, 0
  %422 = vmatprep.subr.mxu0 0.0
  %423 = vmatpush1.msra.mxu0 0.0
  %424 = vmatprep.subr.mxu0 0.0
  %425 = vmatpush1.msra.mxu0 0.0
  %426 = vmatprep.subr.mxu0 0.0
  %427 = vmatpush1.msra.mxu0 0.0
  %428 = vmatprep.subr.mxu0 0.0
  %429 = vmatpush1.msra.mxu0 0.0
  %430 = vmatprep.subr.mxu0 0.0
  %431 = vmatpush1.msra.mxu0 0.0
  %432 = vmatprep.subr.mxu0 0.0
  %433 = vmatpush1.msra.mxu0 0.0
  %434 = vmatprep.subr.mxu0 0.0
  %435 = vmatpush1.msra.mxu0 0.0
  %436 = vmatprep.subr.mxu0 0.0
  %437 = vmatpush1.msra.mxu0 0.0
  %438 = vmatprep.subr.mxu0 0.0
  %439 = vmatpush1.msra.mxu0 0.0
  %440 = vmatprep.subr.mxu0 0.0
  %441 = vmatpush1.msra.mxu0 0.0
  %442 = vmatprep.subr.mxu0 0.0
  %443 = vmatpush1.msra.mxu0 0.0
  %444 = vmatprep.subr.mxu0 0.0
  %445 = vmatpush1.msra.mxu0 0.0
  %446 = vmatprep.subr.mxu0 0.0
  %447 = vmatpush1.msra.mxu0 0.0
  %448 = vmatprep.subr.mxu0 0.0
  %449 = vmatpush1.msra.mxu0 0.0
  %450 = vmatprep.subr.mxu0 0.0
  %451 = vmatpush1.msra.mxu0 0.0
  %452 = vmatprep.subr.mxu0 0.0
  %453 = vmatpush1.msra.mxu0 %v26
  %454 = vmatprep.subr.mxu0 0.0
  %455 = vmatpush2.msra.mxu0 0.0
  %456 = vmatprep.subr.mxu0 0.0
  %457 = vmatpush2.msra.mxu0 0.0
  %458 = vmatprep.subr.mxu0 0.0
  %459 = vmatpush2.msra.mxu0 0.0
  %460 = vmatprep.subr.mxu0 0.0
  %461 = vmatpush2.msra.mxu0 0.0
  %462 = vmatprep.subr.mxu0 0.0
  %463 = vmatpush2.msra.mxu0 0.0
  %464 = vmatprep.subr.mxu0 0.0
  %465 = vmatpush2.msra.mxu0 0.0
  %466 = vmatprep.subr.mxu0 0.0
  %467 = vmatpush2.msra.mxu0 0.0
  %468 = vmatprep.subr.mxu0 0.0
  %469 = vmatpush2.msra.mxu0 0.0
  %470 = vmatprep.subr.mxu0 0.0
  %471 = vmatpush2.msra.mxu0 0.0
  %472 = vmatprep.subr.mxu0 0.0
  %473 = vmatpush2.msra.mxu0 0.0
  %474 = vmatprep.subr.mxu0 0.0
  %475 = vmatpush2.msra.mxu0 0.0
  %476 = vmatprep.subr.mxu0 0.0
  %477 = vmatpush2.msra.mxu0 0.0
  %478 = vmatprep.subr.mxu0 0.0
  %479 = vmatpush2.msra.mxu0 0.0
  %480 = vmatprep.subr.mxu0 0.0
  %481 = vmatpush2.msra.mxu0 0.0
  %482 = vmatprep.subr.mxu0 0.0
  %483 = vmatpush2.msra.mxu0 0.0
  %484 = vmatprep.subr.mxu0 0.0
  %485 = vmatpush2.msra.mxu0 0.0
  %486 = vmatprep.mubr.f32.mxu0 0.0
  %487 = vmatmul.mubr.f32.gmra.mxu0 %v420
  %v488 = vpop.f32.mrf.mxu0
  %v489 = vadd.f32 0.0, %v488
  %v490 = vpop.f32.mrf.mxu0
  %491 = vdwg.mxu0
  %v492 = vadd.f32 %v418, %v489
  %v493 = vtanh.pop %v492
  %s494 = scalar_lea.vmem %s2, 40
  %495 = vst.msk [vmem:[%s494] sm:$0xff] %vm20, %v493
  %s496 = scalar_lea.vmem %s0, 48
  %v497 = vld [vmem:[%s496] sm:$0xff]
  %v499 = vsel %vm20, %v493, 0
  %501 = vmatprep.subr.mxu0 0.0
  %502 = vmatpush1.msra.mxu0 0.0
  %503 = vmatprep.subr.mxu0 0.0
  %504 = vmatpush1.msra.mxu0 0.0
  %505 = vmatprep.subr.mxu0 0.0
  %506 = vmatpush1.msra.mxu0 0.0
  %507 = vmatprep.subr.mxu0 0.0
  %508 = vmatpush1.msra.mxu0 0.0
  %509 = vmatprep.subr.mxu0 0.0
  %510 = vmatpush1.msra.mxu0 0.0
  %511 = vmatprep.subr.mxu0 0.0
  %512 = vmatpush1.msra.mxu0 0.0
  %513 = vmatprep.subr.mxu0 0.0
  %514 = vmatpush1.msra.mxu0 0.0
  %515 = vmatprep.subr.mxu0 0.0
  %516 = vmatpush1.msra.mxu0 0.0
  %517 = vmatprep.subr.mxu0 0.0
  %518 = vmatpush1.msra.mxu0 0.0
  %519 = vmatprep.subr.mxu0 0.0
  %520 = vmatpush1.msra.mxu0 0.0
  %521 = vmatprep.subr.mxu0 0.0
  %522 = vmatpush1.msra.mxu0 0.0
  %523 = vmatprep.subr.mxu0 0.0
  %524 = vmatpush1.msra.mxu0 0.0
  %525 = vmatprep.subr.mxu0 0.0
  %526 = vmatpush1.msra.mxu0 0.0
  %527 = vmatprep.subr.mxu0 0.0
  %528 = vmatpush1.msra.mxu0 0.0
  %529 = vmatprep.subr.mxu0 0.0
  %530 = vmatpush1.msra.mxu0 0.0
  %531 = vmatprep.subr.mxu0 0.0
  %532 = vmatpush1.msra.mxu0 %v26
  %533 = vmatprep.subr.mxu0 0.0
  %534 = vmatpush2.msra.mxu0 0.0
  %535 = vmatprep.subr.mxu0 0.0
  %536 = vmatpush2.msra.mxu0 0.0
  %537 = vmatprep.subr.mxu0 0.0
  %538 = vmatpush2.msra.mxu0 0.0
  %539 = vmatprep.subr.mxu0 0.0
  %540 = vmatpush2.msra.mxu0 0.0
  %541 = vmatprep.subr.mxu0 0.0
  %542 = vmatpush2.msra.mxu0 0.0
  %543 = vmatprep.subr.mxu0 0.0
  %544 = vmatpush2.msra.mxu0 0.0
  %545 = vmatprep.subr.mxu0 0.0
  %546 = vmatpush2.msra.mxu0 0.0
  %547 = vmatprep.subr.mxu0 0.0
  %548 = vmatpush2.msra.mxu0 0.0
  %549 = vmatprep.subr.mxu0 0.0
  %550 = vmatpush2.msra.mxu0 0.0
  %551 = vmatprep.subr.mxu0 0.0
  %552 = vmatpush2.msra.mxu0 0.0
  %553 = vmatprep.subr.mxu0 0.0
  %554 = vmatpush2.msra.mxu0 0.0
  %555 = vmatprep.subr.mxu0 0.0
  %556 = vmatpush2.msra.mxu0 0.0
  %557 = vmatprep.subr.mxu0 0.0
  %558 = vmatpush2.msra.mxu0 0.0
  %559 = vmatprep.subr.mxu0 0.0
  %560 = vmatpush2.msra.mxu0 0.0
  %561 = vmatprep.subr.mxu0 0.0
  %562 = vmatpush2.msra.mxu0 0.0
  %563 = vmatprep.subr.mxu0 0.0
  %564 = vmatpush2.msra.mxu0 0.0
  %565 = vmatprep.mubr.f32.mxu0 0.0
  %566 = vmatmul.mubr.f32.gmra.mxu0 %v499
  %v567 = vpop.f32.mrf.mxu0
  %v568 = vadd.f32 0.0, %v567
  %v569 = vpop.f32.mrf.mxu0
  %570 = vdwg.mxu0
  %v571 = vadd.f32 %v497, %v568
  %v572 = vtanh.pop %v571
  %s573 = scalar_lea.vmem %s2, 48
  %574 = vst.msk [vmem:[%s573] sm:$0xff] %vm20, %v572
  %s575 = scalar_lea.vmem %s0, 56
  %v576 = vld [vmem:[%s575] sm:$0xff]
  %v578 = vsel %vm20, %v572, 0
  %580 = vmatprep.subr.mxu0 0.0
  %581 = vmatpush1.msra.mxu0 0.0
  %582 = vmatprep.subr.mxu0 0.0
  %583 = vmatpush1.msra.mxu0 0.0
  %584 = vmatprep.subr.mxu0 0.0
  %585 = vmatpush1.msra.mxu0 0.0
  %586 = vmatprep.subr.mxu0 0.0
  %587 = vmatpush1.msra.mxu0 0.0
  %588 = vmatprep.subr.mxu0 0.0
  %589 = vmatpush1.msra.mxu0 0.0
  %590 = vmatprep.subr.mxu0 0.0
  %591 = vmatpush1.msra.mxu0 0.0
  %592 = vmatprep.subr.mxu0 0.0
  %593 = vmatpush1.msra.mxu0 0.0
  %594 = vmatprep.subr.mxu0 0.0
  %595 = vmatpush1.msra.mxu0 0.0
  %596 = vmatprep.subr.mxu0 0.0
  %597 = vmatpush1.msra.mxu0 0.0
  %598 = vmatprep.subr.mxu0 0.0
  %599 = vmatpush1.msra.mxu0 0.0
  %600 = vmatprep.subr.mxu0 0.0
  %601 = vmatpush1.msra.mxu0 0.0
  %602 = vmatprep.subr.mxu0 0.0
  %603 = vmatpush1.msra.mxu0 0.0
  %604 = vmatprep.subr.mxu0 0.0
  %605 = vmatpush1.msra.mxu0 0.0
  %606 = vmatprep.subr.mxu0 0.0
  %607 = vmatpush1.msra.mxu0 0.0
  %608 = vmatprep.subr.mxu0 0.0
  %609 = vmatpush1.msra.mxu0 0.0
  %610 = vmatprep.subr.mxu0 0.0
  %611 = vmatpush1.msra.mxu0 %v26
  %612 = vmatprep.subr.mxu0 0.0
  %613 = vmatpush2.msra.mxu0 0.0
  %614 = vmatprep.subr.mxu0 0.0
  %615 = vmatpush2.msra.mxu0 0.0
  %616 = vmatprep.subr.mxu0 0.0
  %617 = vmatpush2.msra.mxu0 0.0
  %618 = vmatprep.subr.mxu0 0.0
  %619 = vmatpush2.msra.mxu0 0.0
  %620 = vmatprep.subr.mxu0 0.0
  %621 = vmatpush2.msra.mxu0 0.0
  %622 = vmatprep.subr.mxu0 0.0
  %623 = vmatpush2.msra.mxu0 0.0
  %624 = vmatprep.subr.mxu0 0.0
  %625 = vmatpush2.msra.mxu0 0.0
  %626 = vmatprep.subr.mxu0 0.0
  %627 = vmatpush2.msra.mxu0 0.0
  %628 = vmatprep.subr.mxu0 0.0
  %629 = vmatpush2.msra.mxu0 0.0
  %630 = vmatprep.subr.mxu0 0.0
  %631 = vmatpush2.msra.mxu0 0.0
  %632 = vmatprep.subr.mxu0 0.0
  %633 = vmatpush2.msra.mxu0 0.0
  %634 = vmatprep.subr.mxu0 0.0
  %635 = vmatpush2.msra.mxu0 0.0
  %636 = vmatprep.subr.mxu0 0.0
  %637 = vmatpush2.msra.mxu0 0.0
  %638 = vmatprep.subr.mxu0 0.0
  %639 = vmatpush2.msra.mxu0 0.0
  %640 = vmatprep.subr.mxu0 0.0
  %641 = vmatpush2.msra.mxu0 0.0
  %642 = vmatprep.subr.mxu0 0.0
  %643 = vmatpush2.msra.mxu0 0.0
  %644 = vmatprep.mubr.f32.mxu0 0.0
  %645 = vmatmul.mubr.f32.gmra.mxu0 %v578
  %v646 = vpop.f32.mrf.mxu0
  %v647 = vadd.f32 0.0, %v646
  %v648 = vpop.f32.mrf.mxu0
  %649 = vdwg.mxu0
  %v650 = vadd.f32 %v576, %v647
  %v651 = vtanh.pop %v650
  %s652 = scalar_lea.vmem %s2, 56
  %653 = vst.msk [vmem:[%s652] sm:$0xff] %vm20, %v651
  %654 = vst.msk [vmem:[#allocation2] sm:$0xff] %vm20, %v651
  // Predicated region
  $region14: #{rnn_forward_pallas.1} parent=0 // pred_check
    _
  $region15: #{rnn_forward_pallas.1} parent=0 // pred_check_branch
    %656 = sbr.rel (0) target = $region17
  $region16: #{rnn_forward_pallas.1} parent=0 // pred_region
    _
  $region17: #{rnn_forward_pallas.1} parent=0 // pred_fallthru
    _
  // Predicated region
  $region18: #{rnn_forward_pallas.1} parent=0 // pred_check
    _
  $region19: #{rnn_forward_pallas.1} parent=0 // pred_check_branch
    %658 = sbr.rel (0) target = $region21
  $region20: #{rnn_forward_pallas.1} parent=0 // pred_region
    _
  $region21: #{rnn_forward_pallas.1} parent=0 // pred_fallthru
    _

</llo_original>
